<compile_context>
chip_gen: v5e
topology: v5e:2x2
jax: 0.10.0
libtpu: 0.0.40
codegen_flags: <defaults>
</compile_context>

<pallas_src>
import functools

import jax
import jax.numpy as jnp
from jax.experimental import pallas as pl
from jax.experimental.pallas import tpu as pltpu


def _round_up(x, m):
    return ((x + m - 1) // m) * m


def _agru_cell_kernel(x_ref, h_ref, att_ref, wih_rn_ref, whh_rn_ref, bias_ref,
                      out_ref):
    x = x_ref[...]            # (TB, I)
    h = h_ref[...]            # (TB, H)
    att = att_ref[...]        # (TB, 1)
    b = bias_ref[...]         # (1, 2H)  -> [bias_r | bias_n]

    # gi = x @ W_ih_rn^T + b ; gh = h @ W_hh_rn^T + b   (MXU, f32 accumulation).
    # bias is added to both, matching the PyTorch forward exactly.
    gi = jnp.dot(x, wih_rn_ref[...], preferred_element_type=jnp.float32) + b
    gh = jnp.dot(h, whh_rn_ref[...], preferred_element_type=jnp.float32) + b

    H = h.shape[-1]
    i_r, i_n = gi[:, :H], gi[:, H:]
    h_r, h_n = gh[:, :H], gh[:, H:]

    reset_gate = jax.nn.sigmoid(i_r + h_r)
    new_state = jnp.tanh(i_n + reset_gate * h_n)

    h_f32 = h.astype(jnp.float32)
    hy = (1.0 - att) * h_f32 + att * new_state
    out_ref[...] = hy.astype(out_ref.dtype)


def prepare_agru_params(weight_ih, weight_hh, bias_hh, weight_dtype=jnp.float32):
    """One-time parameter preparation (call ONCE, reuse across timesteps).

    PyTorch layout in:
      weight_ih: (3H, I), weight_hh: (3H, H), bias_hh: (3H,)
    Returns the r/n-only, pre-transposed operands the kernel consumes:
      wih_t_rn: (I, 2H), whh_t_rn: (H, 2H), bias_rn: (1, 2H)
    """
    H = weight_hh.shape[1]
    w_ih_rn = jnp.concatenate([weight_ih[:H], weight_ih[2 * H:]], axis=0)   # (2H, I)
    w_hh_rn = jnp.concatenate([weight_hh[:H], weight_hh[2 * H:]], axis=0)   # (2H, H)
    b_rn = jnp.concatenate([bias_hh[:H], bias_hh[2 * H:]], axis=0)          # (2H,)
    wih_t_rn = jnp.asarray(w_ih_rn.T, dtype=weight_dtype)                   # (I, 2H)
    whh_t_rn = jnp.asarray(w_hh_rn.T, dtype=weight_dtype)                   # (H, 2H)
    bias_rn = jnp.asarray(b_rn.reshape(1, -1), dtype=jnp.float32)           # (1, 2H)
    return wih_t_rn, whh_t_rn, bias_rn


def _vmem_budget_bytes(TB, I, H, weight_bytes):
    weights = (I * 2 * H + H * 2 * H + 2 * H) * weight_bytes
    acts = 2 * (TB * I + 2 * TB * H + TB) * 4      # double-buffered I/O tiles
    interm = 8 * TB * 2 * H * 4                     # gi/gh/gate temporaries
    est = weights + acts + interm
    # leave headroom, budgeted against v7x's 64 MiB per TensorCore
    return int(min(max(2 * est, 8 << 20), 48 << 20))


@functools.partial(jax.jit, static_argnames=("batch_tile",))
def agru_cell_prepared(inputs, hx, att_score, wih_t_rn, whh_t_rn, bias_rn,
                       batch_tile=256):
    """AGRUCell forward with pre-prepared (r/n-only, transposed) parameters."""
    B, I = inputs.shape
    H = hx.shape[1]
    att2d = att_score.reshape(-1, 1).astype(jnp.float32)         # (B, 1)

    # Batch tile: multiple of 8 sublanes, capped at batch_tile.
    TB = min(batch_tile, _round_up(B, 8))
    Bp = _round_up(B, TB)
    if Bp != B:
        pad = Bp - B
        inputs = jnp.pad(inputs, ((0, pad), (0, 0)))
        hx_in = jnp.pad(hx, ((0, pad), (0, 0)))
        att2d = jnp.pad(att2d, ((0, pad), (0, 0)))
    else:
        hx_in = hx

    grid = (Bp // TB,)

    flops = 2 * Bp * (I + H) * (2 * H)
    bytes_accessed = 4 * (Bp * I + Bp * H + Bp + Bp * H) + \
        jnp.dtype(wih_t_rn.dtype).itemsize * (I + H) * 2 * H + 4 * 2 * H
    cost = pl.CostEstimate(flops=flops,
                           transcendentals=2 * Bp * H,
                           bytes_accessed=int(bytes_accessed))

    out = pl.pallas_call(
        _agru_cell_kernel,
        out_shape=jax.ShapeDtypeStruct((Bp, H), inputs.dtype),
        grid_spec=pltpu.PrefetchScalarGridSpec(
            num_scalar_prefetch=0,
            grid=grid,
            in_specs=[
                pl.BlockSpec((TB, I), lambda i: (i, 0)),       # inputs tile
                pl.BlockSpec((TB, H), lambda i: (i, 0)),       # hx tile
                pl.BlockSpec((TB, 1), lambda i: (i, 0)),       # att tile
                pl.BlockSpec((I, 2 * H), lambda i: (0, 0)),    # W_ih_rn^T (resident)
                pl.BlockSpec((H, 2 * H), lambda i: (0, 0)),    # W_hh_rn^T (resident)
                pl.BlockSpec((1, 2 * H), lambda i: (0, 0)),    # bias_rn   (resident)
            ],
            out_specs=pl.BlockSpec((TB, H), lambda i: (i, 0)),
        ),
        compiler_params=pltpu.CompilerParams(
            dimension_semantics=("parallel",),
            vmem_limit_bytes=_vmem_budget_bytes(
                TB, I, H, jnp.dtype(wih_t_rn.dtype).itemsize),
        ),
        cost_estimate=cost,
    )(inputs, hx_in, att2d, wih_t_rn, whh_t_rn, bias_rn)

    return out[:B]


def agru_cell(inputs, hx, att_score, weight_ih, weight_hh, bias_hh,
              batch_tile=256, weight_dtype=jnp.float32):
    """Convenience wrapper taking raw PyTorch-layout parameters.

    For recurrent (per-timestep) use, call `prepare_agru_params` once and reuse
    `agru_cell_prepared` so the weight slicing/transpose is not repeated.
    """
    # TODO(synk): if this cell drives a full sequence (DynamicGRU), move the
    # time loop inside a single pallas_call so weights stay VMEM-resident
    # across all timesteps.
    wih_t_rn, whh_t_rn, bias_rn = prepare_agru_params(
        weight_ih, weight_hh, bias_hh, weight_dtype=weight_dtype)
    return agru_cell_prepared(inputs, hx, att_score, wih_t_rn, whh_t_rn,
                              bias_rn, batch_tile=batch_tile)


def agru_cell_ref(inputs, hx, att_score, weight_ih, weight_hh, bias_hh):
    """Pure-JAX reference mirroring the PyTorch forward exactly."""
    gi = inputs @ weight_ih.T + bias_hh
    gh = hx @ weight_hh.T + bias_hh
    H = hx.shape[1]
    i_r, i_n = gi[:, :H], gi[:, 2 * H:]
    h_r, h_n = gh[:, :H], gh[:, 2 * H:]
    reset_gate = jax.nn.sigmoid(i_r + h_r)
    new_state = jnp.tanh(i_n + reset_gate * h_n)
    att = att_score.reshape(-1, 1)
    return (1.0 - att) * hx + att * new_state


if __name__ == "__main__":
    B = 8
    input_size = 32
    hidden_size = 32

    key = jax.random.PRNGKey(0)
    k_x, k_h, k_a, k_wih, k_whh = jax.random.split(key, 5)

    inputs = jax.random.normal(k_x, (B, input_size), dtype=jnp.float32)
    hx = jax.random.normal(k_h, (B, hidden_size), dtype=jnp.float32)
    att_score = jax.random.uniform(k_a, (B,), dtype=jnp.float32)

    # Deterministic parameter init (module leaves weights uninitialized; biases
    # are zero-initialized in __init__).
    weight_ih = 0.1 * jax.random.normal(
        k_wih, (3 * hidden_size, input_size), dtype=jnp.float32)
    weight_hh = 0.1 * jax.random.normal(
        k_whh, (3 * hidden_size, hidden_size), dtype=jnp.float32)
    bias_hh = jnp.zeros((3 * hidden_size,), dtype=jnp.float32)

    # Prepare params once (as a recurrent caller would), then run the kernel.
    wih_t_rn, whh_t_rn, bias_rn = prepare_agru_params(
        weight_ih, weight_hh, bias_hh)
    hy = agru_cell_prepared(inputs, hx, att_score, wih_t_rn, whh_t_rn, bias_rn)
    hy = jax.block_until_ready(hy)

    hy_ref = agru_cell_ref(inputs, hx, att_score, weight_ih, weight_hh, bias_hh)
    assert hy.shape == (B, hidden_size)
    assert jnp.allclose(hy, hy_ref, atol=1e-5, rtol=1e-5), "mismatch vs reference"

    # Also exercise the raw-parameter convenience wrapper.
    hy2 = jax.block_until_ready(
        agru_cell(inputs, hx, att_score, weight_ih, weight_hh, bias_hh))
    assert jnp.allclose(hy2, hy_ref, atol=1e-5, rtol=1e-5), "wrapper mismatch"

    print("KERNEL_OK")
</pallas_src>

<mosaic_0001>
module attributes {stable_mosaic.version = 11 : i64} {
  func.func @_agru_cell_kernel(%arg0: i32, %arg1: memref<8x32xf32, #tpu.memory_space<vmem>>, %arg2: memref<8x32xf32, #tpu.memory_space<vmem>>, %arg3: memref<8x1xf32, #tpu.memory_space<vmem>>, %arg4: memref<32x64xf32, #tpu.memory_space<vmem>>, %arg5: memref<32x64xf32, #tpu.memory_space<vmem>>, %arg6: memref<1x64xf32, #tpu.memory_space<vmem>>, %arg7: memref<8x32xf32, #tpu.memory_space<vmem>>) attributes {dimension_semantics = [#tpu.dimension_semantics<parallel>], iteration_bounds = array<i64: 1>, scalar_prefetch = 0 : i64, scratch_operands = 0 : i64, tpu.core_type = #tpu.core_type<tc>, window_params = [{transform_indices = @transform_0, window_bounds = array<i64: 8, 32>}, {transform_indices = @transform_1, window_bounds = array<i64: 8, 32>}, {transform_indices = @transform_2, window_bounds = array<i64: 8, 1>}, {pipeline_mode = #tpu.pipeline_mode<synchronous>, transform_indices = @transform_3, window_bounds = array<i64: 32, 64>}, {pipeline_mode = #tpu.pipeline_mode<synchronous>, transform_indices = @transform_4, window_bounds = array<i64: 32, 64>}, {pipeline_mode = #tpu.pipeline_mode<synchronous>, transform_indices = @transform_5, window_bounds = array<i64: 1, 64>}, {transform_indices = @transform_6, window_bounds = array<i64: 8, 32>}]} {
    %c0 = arith.constant 0 : index
    %c0_0 = arith.constant 0 : index
    %0 = vector.load %arg1[%c0, %c0_0] : memref<8x32xf32, #tpu.memory_space<vmem>>, vector<8x32xf32>
    %c0_1 = arith.constant 0 : index
    %c0_2 = arith.constant 0 : index
    %1 = vector.load %arg2[%c0_1, %c0_2] : memref<8x32xf32, #tpu.memory_space<vmem>>, vector<8x32xf32>
    %c0_3 = arith.constant 0 : index
    %c0_4 = arith.constant 0 : index
    %2 = vector.load %arg3[%c0_3, %c0_4] : memref<8x1xf32, #tpu.memory_space<vmem>>, vector<8x1xf32>
    %c0_5 = arith.constant 0 : index
    %c0_6 = arith.constant 0 : index
    %3 = vector.load %arg6[%c0_5, %c0_6] : memref<1x64xf32, #tpu.memory_space<vmem>>, vector<1x64xf32>
    %c0_7 = arith.constant 0 : index
    %c0_8 = arith.constant 0 : index
    %4 = vector.load %arg4[%c0_7, %c0_8] : memref<32x64xf32, #tpu.memory_space<vmem>>, vector<32x64xf32>
    %cst = arith.constant dense<0.000000e+00> : vector<8x64xf32>
    %5 = tpu.matmul %0, %4, %cst {dimension_numbers = #tpu.dot_dimension_numbers<[1], [0], [0], [1], [0, 0, 1, 1], [], []>} : vector<8x32xf32>, vector<32x64xf32>, vector<8x64xf32> -> vector<8x64xf32>
    %6 = vector.broadcast %3 : vector<1x64xf32> to vector<8x64xf32>
    %7 = arith.addf %5, %6 : vector<8x64xf32>
    %c0_9 = arith.constant 0 : index
    %c0_10 = arith.constant 0 : index
    %8 = vector.load %arg5[%c0_9, %c0_10] : memref<32x64xf32, #tpu.memory_space<vmem>>, vector<32x64xf32>
    %cst_11 = arith.constant dense<0.000000e+00> : vector<8x64xf32>
    %9 = tpu.matmul %1, %8, %cst_11 {dimension_numbers = #tpu.dot_dimension_numbers<[1], [0], [0], [1], [0, 0, 1, 1], [], []>} : vector<8x32xf32>, vector<32x64xf32>, vector<8x64xf32> -> vector<8x64xf32>
    %10 = vector.broadcast %3 : vector<1x64xf32> to vector<8x64xf32>
    %11 = arith.addf %9, %10 : vector<8x64xf32>
    %12 = vector.extract_strided_slice %7 {offsets = [0, 0], sizes = [8, 32], strides = [1, 1]} : vector<8x64xf32> to vector<8x32xf32>
    %13 = vector.extract_strided_slice %7 {offsets = [0, 32], sizes = [8, 32], strides = [1, 1]} : vector<8x64xf32> to vector<8x32xf32>
    %14 = vector.extract_strided_slice %11 {offsets = [0, 0], sizes = [8, 32], strides = [1, 1]} : vector<8x64xf32> to vector<8x32xf32>
    %15 = vector.extract_strided_slice %11 {offsets = [0, 32], sizes = [8, 32], strides = [1, 1]} : vector<8x64xf32> to vector<8x32xf32>
    %16 = arith.addf %12, %14 : vector<8x32xf32>
    %17 = arith.negf %16 : vector<8x32xf32>
    %18 = math.exp %17 : vector<8x32xf32>
    %cst_12 = arith.constant 1.000000e+00 : f32
    %19 = vector.broadcast %cst_12 : f32 to vector<8x32xf32>
    %20 = arith.addf %19, %18 : vector<8x32xf32>
    %21 = arith.divf %19, %20 : vector<8x32xf32>
    %22 = arith.mulf %21, %15 : vector<8x32xf32>
    %23 = arith.addf %13, %22 : vector<8x32xf32>
    %24 = math.tanh %23 : vector<8x32xf32>
    %cst_13 = arith.constant 1.000000e+00 : f32
    %25 = vector.broadcast %cst_13 : f32 to vector<8x1xf32>
    %26 = arith.subf %25, %2 : vector<8x1xf32>
    %27 = vector.broadcast %26 : vector<8x1xf32> to vector<8x32xf32>
    %28 = arith.mulf %27, %1 : vector<8x32xf32>
    %29 = vector.broadcast %2 : vector<8x1xf32> to vector<8x32xf32>
    %30 = arith.mulf %29, %24 : vector<8x32xf32>
    %31 = arith.addf %28, %30 : vector<8x32xf32>
    %c0_14 = arith.constant 0 : index
    %c0_15 = arith.constant 0 : index
    %32 = vector.load %arg7[%c0_14, %c0_15] : memref<8x32xf32, #tpu.memory_space<vmem>>, vector<8x32xf32>
    tpu.vector_store %arg7[%c0_14, %c0_15], %31 {strides = array<i32>} : memref<8x32xf32, #tpu.memory_space<vmem>>, vector<8x32xf32>,
    return
  }
  func.func @transform_0(%arg0: i32) -> (i32, i32) {
    %c0_i32 = arith.constant 0 : i32
    %c0_i32_0 = arith.constant 0 : i32
    return %arg0, %c0_i32 : i32, i32
  }
  func.func @transform_1(%arg0: i32) -> (i32, i32) {
    %c0_i32 = arith.constant 0 : i32
    %c0_i32_0 = arith.constant 0 : i32
    return %arg0, %c0_i32 : i32, i32
  }
  func.func @transform_2(%arg0: i32) -> (i32, i32) {
    %c0_i32 = arith.constant 0 : i32
    %c0_i32_0 = arith.constant 0 : i32
    return %arg0, %c0_i32 : i32, i32
  }
  func.func @transform_3(%arg0: i32) -> (i32, i32) {
    %c0_i32 = arith.constant 0 : i32
    %c0_i32_0 = arith.constant 0 : i32
    %c0_i32_1 = arith.constant 0 : i32
    return %c0_i32, %c0_i32_0 : i32, i32
  }
  func.func @transform_4(%arg0: i32) -> (i32, i32) {
    %c0_i32 = arith.constant 0 : i32
    %c0_i32_0 = arith.constant 0 : i32
    %c0_i32_1 = arith.constant 0 : i32
    return %c0_i32, %c0_i32_0 : i32, i32
  }
  func.func @transform_5(%arg0: i32) -> (i32, i32) {
    %c0_i32 = arith.constant 0 : i32
    %c0_i32_0 = arith.constant 0 : i32
    %c0_i32_1 = arith.constant 0 : i32
    return %c0_i32, %c0_i32_0 : i32, i32
  }
  func.func @transform_6(%arg0: i32) -> (i32, i32) {
    %c0_i32 = arith.constant 0 : i32
    %c0_i32_0 = arith.constant 0 : i32
    return %arg0, %c0_i32 : i32, i32
  }
}

</mosaic_0001>

<llo_original>
// kernel: agru_cell_prepared.1
$region0: #{agru_cell_prepared.1}
  #allocation0 [shape = 'u32[]', space=smem, size = 0x4, offset = 0x4, fixed_abs, tag = 'smem constant byte address 0x4 - core index']
  #allocation1 [shape = 'u32[72,128]{1,0:T(1,128)}', space=vmem, size = 0x9000, scoped, tag = 'internal scratch']
  %s0 = inlined_call_operand.vmem [shape: f32[8,32], index: 0, kind: input, shape index: {}]
  %s1 = inlined_call_operand.hbm [shape: f32[8,32], index: 1, kind: input, shape index: {}]
  %s2 = inlined_call_operand.vmem [shape: f32[8,1], index: 2, kind: input, shape index: {}]
  %s3 = inlined_call_operand.hbm [shape: f32[32,64], index: 3, kind: input, shape index: {}]
  %s4 = inlined_call_operand.hbm [shape: f32[32,64], index: 4, kind: input, shape index: {}]
  %s5 = inlined_call_operand.vmem [shape: f32[1,64], index: 5, kind: input, shape index: {}]
  %s6 = inlined_call_operand.hbm [shape: f32[8,32], index: 6, kind: output, shape index: {}]
  %s7 = sld [smem:[#allocation0]]
  $region46: #{agru_cell_prepared.1} parent=0
    _
  %s9 = ssub.s32 1, %s7
  %s10 = scalar_select 0, %s9, %s7
  $region1: #{agru_cell_prepared.1} parent=0
    #allocation2 [shape = 'u8[4096]{0}', space=vmem, size = 0x1000, scoped, tag = 'input window, operand 1, single buffered']
    #allocation3 [shape = 's32[1]{0}', space=sflag, size = 0x4, scoped, tag = 'scoped memory for agru_cell_prepared.1']
    #allocation4 [shape = 's32[1]{0}', space=sflag, size = 0x4, scoped, tag = 'scoped memory for agru_cell_prepared.1']
    #allocation5 [shape = 'u8[16384]{0}', space=vmem, size = 0x4000, scoped, tag = 'input window, operand 3, single buffered']
    #allocation6 [shape = 's32[1]{0}', space=sflag, size = 0x4, scoped, tag = 'scoped memory for agru_cell_prepared.1']
    #allocation7 [shape = 'u8[16384]{0}', space=vmem, size = 0x4000, scoped, tag = 'input window, operand 4, single buffered']
    #allocation8 [shape = 'u8[4096]{0}', space=vmem, size = 0x1000, scoped, tag = 'output window, operand 0, single buffered']
    %11 = vsyncpa [#allocation3], 0
    %12 = vsyncpa [#allocation6], 0
    %13 = vsyncpa [#allocation4], 0
    // Predicated region
    $region2: #{agru_cell_prepared.1} parent=1 // pred_check
      _
    $region3: #{agru_cell_prepared.1} parent=1 // pred_check_branch
      %15 = sbr.rel (0) target = $region5
    $region4: #{agru_cell_prepared.1} parent=1 // pred_region
      _
    $region5: #{agru_cell_prepared.1} parent=1 // pred_fallthru
      _
    // Predicated region
    $region6: #{agru_cell_prepared.1} parent=1 // pred_check
      _
    $region7: #{agru_cell_prepared.1} parent=1 // pred_check_branch
      %17 = sbr.rel (0) target = $region9
    $region8: #{agru_cell_prepared.1} parent=1 // pred_region
      %19 = vsyncadd [#allocation3], 0
      %s21 = sshll.u32 %s1, 4
      %s22 = int_to_ptr.hbm [resolvable:$true] %s21
      %s23 = sshll.u32 [#allocation2], 4
      %s24 = int_to_ptr.vmem [resolvable:$true] %s23
      %26 = dma.hbm_to_vmem [thread:$0]  %s22, 128, %s24, [#allocation3]
    $region9: #{agru_cell_prepared.1} parent=1 // pred_fallthru
      _
    // Predicated region
    $region10: #{agru_cell_prepared.1} parent=1 // pred_check
      _
    $region11: #{agru_cell_prepared.1} parent=1 // pred_check_branch
      %28 = sbr.rel (0) target = $region13
    $region12: #{agru_cell_prepared.1} parent=1 // pred_region
      _
    $region13: #{agru_cell_prepared.1} parent=1 // pred_fallthru
      _
    // Predicated region
    $region14: #{agru_cell_prepared.1} parent=1 // pred_check
      _
    $region15: #{agru_cell_prepared.1} parent=1 // pred_check_branch
      %30 = sbr.rel (0) target = $region17
    $region16: #{agru_cell_prepared.1} parent=1 // pred_region
      %32 = vsyncadd [#allocation6], 0
      %s33 = sshll.u32 %s3, 4
      %s34 = int_to_ptr.hbm [resolvable:$true] %s33
      %s35 = sshll.u32 [#allocation5], 4
      %s36 = int_to_ptr.vmem [resolvable:$true] %s35
      %41 = dma.hbm_to_vmem [thread:$0]  %s34, 512, %s36, [#allocation6], 128, 128, 8
    $region17: #{agru_cell_prepared.1} parent=1 // pred_fallthru
      _
    // Predicated region
    $region18: #{agru_cell_prepared.1} parent=1 // pred_check
      _
    $region19: #{agru_cell_prepared.1} parent=1 // pred_check_branch
      %43 = sbr.rel (0) target = $region21
    $region20: #{agru_cell_prepared.1} parent=1 // pred_region
      %45 = vsyncadd [#allocation6], 0
      %s46 = sshll.u32 %s4, 4
      %s47 = int_to_ptr.hbm [resolvable:$true] %s46
      %s48 = sshll.u32 [#allocation7], 4
      %s49 = int_to_ptr.vmem [resolvable:$true] %s48
      %54 = dma.hbm_to_vmem [thread:$0]  %s47, 512, %s49, [#allocation6], 128, 128, 8
    $region21: #{agru_cell_prepared.1} parent=1 // pred_fallthru
      _
    // Predicated region
    $region22: #{agru_cell_prepared.1} parent=1 // pred_check
      _
    $region23: #{agru_cell_prepared.1} parent=1 // pred_check_branch
      %56 = sbr.rel (0) target = $region25
    $region24: #{agru_cell_prepared.1} parent=1 // pred_region
      _
    $region25: #{agru_cell_prepared.1} parent=1 // pred_fallthru
      _
    // Predicated region
    $region26: #{agru_cell_prepared.1} parent=1 // pred_check
      _
    $region27: #{agru_cell_prepared.1} parent=1 // pred_check_branch
      %58 = sbr.rel (0) target = $region29
    $region28: #{agru_cell_prepared.1} parent=1 // pred_region
      %60 = dma.done [#allocation3], 128
    $region29: #{agru_cell_prepared.1} parent=1 // pred_fallthru
      _
    // Predicated region
    $region30: #{agru_cell_prepared.1} parent=1 // pred_check
      _
    $region31: #{agru_cell_prepared.1} parent=1 // pred_check_branch
      %62 = sbr.rel (0) target = $region33
    $region32: #{agru_cell_prepared.1} parent=1 // pred_region
      %64 = dma.done [#allocation6], 512
    $region33: #{agru_cell_prepared.1} parent=1 // pred_fallthru
      _
    // Predicated region
    $region34: #{agru_cell_prepared.1} parent=1 // pred_check
      _
    $region35: #{agru_cell_prepared.1} parent=1 // pred_check_branch
      %66 = sbr.rel (0) target = $region37
    $region36: #{agru_cell_prepared.1} parent=1 // pred_region
      %68 = dma.done [#allocation6], 512
    $region37: #{agru_cell_prepared.1} parent=1 // pred_fallthru
      _
    %v69 = vld [vmem:[%s0] sm:$0xff]
    %v70 = vld [vmem:[#allocation2] sm:$0xff]
    %v71 = vld [vmem:[%s2] sm:$0xff]
    %v72 = vld [vmem:[%s5] sm:$0x1]
    %v73 = vld [vmem:[#allocation5] sm:$0xff]
    %v74 = vld [vmem:[#allocation5 + $0x8] sm:$0xff]
    %v75 = vld [vmem:[#allocation5 + $0x10] sm:$0xff]
    %v76 = vld [vmem:[#allocation5 + $0x18] sm:$0xff]
    %v78 = vperm.slane %v72, 0
    %vm80 = vcmask 261120
    %v82 = vsel %vm80, %v69, 0
    %84 = vmatpush.msra.mxu0 0.0
    %85 = vmatpush.msra.mxu0 0.0
    %86 = vmatpush.msra.mxu0 0.0
    %87 = vmatpush.msra.mxu0 0.0
    %88 = vmatpush.msra.mxu0 0.0
    %89 = vmatpush.msra.mxu0 0.0
    %90 = vmatpush.msra.mxu0 0.0
    %91 = vmatpush.msra.mxu0 0.0
    %92 = vmatpush.msra.mxu0 0.0
    %93 = vmatpush.msra.mxu0 0.0
    %94 = vmatpush.msra.mxu0 0.0
    %95 = vmatpush.msra.mxu0 0.0
    %96 = vmatpush.msra.mxu0 %v76
    %97 = vmatpush.msra.mxu0 %v75
    %98 = vmatpush.msra.mxu0 %v74
    %99 = vmatpush.msra.mxu0 %v73
    %100 = vmatmul.f32.gmra.mxu0 %v82
    %v101 = vpop.f32.mrf.mxu0
    %v102 = vadd.f32 %v78, %v101
    %103 = vdwg.mxu0
    %v104 = vld [vmem:[#allocation7] sm:$0xff]
    %v105 = vld [vmem:[#allocation7 + $0x8] sm:$0xff]
    %v106 = vld [vmem:[#allocation7 + $0x10] sm:$0xff]
    %v107 = vld [vmem:[#allocation7 + $0x18] sm:$0xff]
    %v109 = vsel %vm80, %v70, 0
    %111 = vmatpush.msra.mxu0 0.0
    %112 = vmatpush.msra.mxu0 0.0
    %113 = vmatpush.msra.mxu0 0.0
    %114 = vmatpush.msra.mxu0 0.0
    %115 = vmatpush.msra.mxu0 0.0
    %116 = vmatpush.msra.mxu0 0.0
    %117 = vmatpush.msra.mxu0 0.0
    %118 = vmatpush.msra.mxu0 0.0
    %119 = vmatpush.msra.mxu0 0.0
    %120 = vmatpush.msra.mxu0 0.0
    %121 = vmatpush.msra.mxu0 0.0
    %122 = vmatpush.msra.mxu0 0.0
    %123 = vmatpush.msra.mxu0 %v107
    %124 = vmatpush.msra.mxu0 %v106
    %125 = vmatpush.msra.mxu0 %v105
    %126 = vmatpush.msra.mxu0 %v104
    %127 = vmatmul.f32.gmra.mxu0 %v109
    %v128 = vpop.f32.mrf.mxu0
    %v129 = vadd.f32 %v78, %v128
    %130 = vdwg.mxu0
    %v131 = vadd.f32 %v102, %v129
    %v132 = vxor.u32 %v131, 2147483648
    %v133 = vmul.f32 %v132, 1.442695
    %v134 = vpow.pop %v133
    %v135 = vadd.f32 %v134, 1.0
    %v136 = vrcp.pop %v135
    %v137 = vmul.f32 %v135, %v136
    %v138 = vsub.f32 1.0, %v137
    %v139 = vmul.f32 %v136, %v138
    %v140 = vadd.f32 %v136, %v139
    %vm141 = vweird.f32 %v135
    %vm142 = vweird.f32 %v136
    %vm143 = vmor %vm141, %vm142
    %v144 = vsel %vm143, %v136, %v140
    %v145 = vand.u32 2147483647, %v135
    %vm146 = vcmp.eq.f32.partialorder %v145, 8.507059e+37
    %v147 = vand.u32 %v135, 2147483648
    %v148 = vor.u32 1.1754944e-38, %v147
    %v149 = vsel %vm146, %v148, %v144
    %v150 = vmul.f32 1.0, %v149
    %152 = vrot.lane.b32.xlu0 %v129, 96
    %v153 = vpop.permute.xlu0 %152
    %v155 = vmul.f32 %v150, %v153
    %157 = vrot.lane.b32.xlu0 %v155, 32
    %v158 = vpop.permute.xlu0 %157
    %v160 = vadd.f32 %v102, %v158
    %v161 = vtanh.pop %v160
    %v162 = vsub.f32 1.0, %v71
    %164 = vset.pattern.permute.xlu0 0
    %165 = vperm.xlu0 %164, %v162
    %v166 = vpop.permute.xlu0 %165
    %v168 = vmul.f32 %v166, %v70
    %170 = vset.pattern.permute.xlu0 0
    %171 = vperm.xlu0 %170, %v71
    %v172 = vpop.permute.xlu0 %171
    %v174 = vmul.f32 %v172, %v161
    %176 = vrot.lane.b32.xlu0 %v174, 96
    %v177 = vpop.permute.xlu0 %176
    %v179 = vadd.f32 %v168, %v177
    %180 = vst.msk [vmem:[#allocation8] sm:$0xff] %vm80, %v179
    // Predicated region
    $region38: #{agru_cell_prepared.1} parent=1 // pred_check
      _
    $region39: #{agru_cell_prepared.1} parent=1 // pred_check_branch
      %182 = sbr.rel (0) target = $region41
    $region40: #{agru_cell_prepared.1} parent=1 // pred_region
      %184 = vsyncadd [#allocation4], 0
      %s186 = sshll.u32 [#allocation8], 4
      %s187 = int_to_ptr.vmem [resolvable:$true] %s186
      %s188 = sshll.u32 %s6, 4
      %s189 = int_to_ptr.hbm [resolvable:$true] %s188
      %191 = dma.vmem_to_hbm [thread:$0]  %s187, 128, %s189, [#allocation4]
    $region41: #{agru_cell_prepared.1} parent=1 // pred_fallthru
      _
    // Predicated region
    $region42: #{agru_cell_prepared.1} parent=1 // pred_check
      _
    $region43: #{agru_cell_prepared.1} parent=1 // pred_check_branch
      %193 = sbr.rel (0) target = $region45
    $region44: #{agru_cell_prepared.1} parent=1 // pred_region
      %195 = dma.done [#allocation4], 128
    $region45: #{agru_cell_prepared.1} parent=1 // pred_fallthru
      _
    %196 = vsyncpa [#allocation3], 1
    %197 = vsyncpa [#allocation6], 1
    %198 = vsyncpa [#allocation4], 1

</llo_original>
